<compile_context>
chip_gen: v7x
topology: tpu7x:2x2x1
jax: 0.10.0
libtpu: 0.0.40
codegen_flags: <defaults>
</compile_context>

<pallas_src>
import jax
import jax.numpy as jnp
from jax.experimental import pallas as pl
from jax.experimental.pallas import tpu as pltpu

HEATMAP_RESOLUTION = 16       # fixed in the module's __init__
OVERLAP_THRESHOLD = 0.5       # conf.training.offsets.overlap_threshold (deterministic choice)
# The argmax(C) >= thr test is implemented as "some channel c>=1 strictly beats
# channel 0" (first-occurrence tie-break); this is exact only for thr in (0, 1].
assert 0.0 < OVERLAP_THRESHOLD <= 1.0
# TODO(synk): only the default 'l1' criterion is implemented (l2 / smooth_l1 untranslated).


def _make_kernel(bb: int, B_valid: int, C: int, D: int, HW: int, clip: float):
    def kernel(skel_ref, loc_ref, pred_ref, off_ref, thm_ref, out_ref):
        g = pl.program_id(0)

        # grid-invariant voxel -> normalized-location planes, hoisted out of the loop
        loc = [loc_ref[k] for k in range(3)]

        def body(i, carry):
            acc_sum, acc_cnt = carry
            b = g * bb + i                                   # global batch index

            # overlap mask: argmax(C) >= 0.5  <=>  argmax >= 1  <=>  some channel
            # c >= 1 strictly beats channel 0 (first-occurrence tie-break).
            if C > 1:
                best_rest = pred_ref[i, 1].astype(jnp.float32)
                for c in range(2, C):
                    best_rest = jnp.maximum(best_rest,
                                            pred_ref[i, c].astype(jnp.float32))
                mask = best_rest > pred_ref[i, 0].astype(jnp.float32)
            else:
                mask = jnp.zeros((D, HW), jnp.bool_)

            mask = jnp.logical_and(
                mask, thm_ref[i].astype(jnp.float32) >= OVERLAP_THRESHOLD)
            mask = jnp.logical_and(mask, b < B_valid)        # padded batches -> no contribution

            total = jnp.zeros((D, HW), jnp.float32)
            for k in range(3):                               # d, h, w offset components
                tgt = jnp.clip(skel_ref[k, b] - loc[k], -clip, clip)
                total = total + jnp.abs(off_ref[i, k].astype(jnp.float32) - tgt)

            # where-select (not multiply) so any padded / garbage values can never poison the sum
            acc_sum = acc_sum + jnp.where(mask, total, 0.0)
            acc_cnt = acc_cnt + mask.astype(jnp.float32)
            return acc_sum, acc_cnt

        zero = jnp.zeros((D, HW), jnp.float32)
        acc_sum, acc_cnt = jax.lax.fori_loop(0, bb, body, (zero, zero),
                                             unroll=(bb <= 4))

        # one cross-lane/sublane reduction + one fused (1,1,2) store per grid step
        lane = jax.lax.broadcasted_iota(jnp.int32, (1, 1, 2), 2)
        out_ref[...] = jnp.where(lane == 0, jnp.sum(acc_sum), jnp.sum(acc_cnt))

    return kernel


def _vmem_capacity_bytes():
    try:
        return int(pltpu.get_tpu_info().vmem_capacity_bytes)
    except Exception:
        return 64 << 20     # conservative fallback (v7x per-TensorCore)


def _choose_batch_block(B, C, D, HW, itemsize):
    """Pick batches-per-grid-step and a matching scoped-VMEM limit."""
    vmem_cap = _vmem_capacity_bytes()
    # Per-generation budget for the double-buffered per-step input blocks:
    # v5e/v6e (128 MiB physical VMEM) -> 24 MiB, v7x (64 MiB per TC) -> ~12 MiB.
    budget = max(2 << 20, min(24 << 20, vmem_cap // 5))
    per_batch = 2 * (C + 3 + 1) * D * HW * itemsize          # 2x for double-buffering
    bb = int(max(1, min(B, budget // max(per_batch, 1))))
    bb = min(bb, max(1, -(-B // 2)))                          # >= 2 grid steps: both v7x TCs busy
    working = bb * per_batch + 2 * 3 * D * HW * 4             # inputs + loc table (double-buffered)
    vmem_limit = int(min(vmem_cap * 3 // 4, max(working + (4 << 20), 16 << 20)))
    return bb, vmem_limit


def heatmap_offset_loss(offsets, target_skeleton, predicted_heatmap, target_heatmap,
                        volume_center=None):
    B, _, D, H, W = offsets.shape
    C = predicted_heatmap.shape[1]
    HW = H * W
    half = HEATMAP_RESOLUTION / 2.0
    clip = 1.0 / half

    skel = target_skeleton if volume_center is None else target_skeleton - volume_center
    # (3, B): long axis last -> the whole-array SMEM ref pads to (8, ceil(B/128)*128) words
    skel = skel.reshape(B, 3).astype(jnp.float32).T

    # native dtypes: no extra HBM cast passes before the kernel
    pred = predicted_heatmap.reshape(B, C, D, HW)
    off = offsets.reshape(B, 3, D, HW)
    thm = target_heatmap.reshape(B, D, HW)

    itemsize = max(pred.dtype.itemsize, off.dtype.itemsize, thm.dtype.itemsize)
    bb, vmem_limit = _choose_batch_block(B, C, D, HW, itemsize)
    G = -(-B // bb)
    B_pad = G * bb
    if B_pad != B:
        # zero-pad the batch axis (padded batches are also masked in-kernel with b < B)
        p = B_pad - B
        pred = jnp.pad(pred, ((0, p), (0, 0), (0, 0), (0, 0)))
        off = jnp.pad(off, ((0, p), (0, 0), (0, 0), (0, 0)))
        thm = jnp.pad(thm, ((0, p), (0, 0), (0, 0)))
        skel = jnp.pad(skel, ((0, 0), (0, p)))

    # grid-invariant voxel -> normalized-location table, (3, D, HW) f32
    dd, hh, ww = jnp.meshgrid(jnp.arange(D, dtype=jnp.float32),
                              jnp.arange(H, dtype=jnp.float32),
                              jnp.arange(W, dtype=jnp.float32), indexing="ij")
    loc = jnp.stack([dd, hh, ww], axis=0).reshape(3, D, HW) / half - 1.0

    # TODO(synk): for much larger volumes (e.g. 64^3) add a second "parallel" grid
    # axis over D (per-(g, d) partial outputs) so the per-step block stays within
    # v7x's 64 MiB VMEM and vreg pressure stays bounded.
    kernel = _make_kernel(bb, B, C, D, HW, clip)

    parts = pl.pallas_call(
        kernel,
        out_shape=jax.ShapeDtypeStruct((G, 1, 2), jnp.float32),
        grid=(G,),
        in_specs=[
            pl.BlockSpec(memory_space=pltpu.MemorySpace.SMEM),        # skeleton (3, B_pad)
            pl.BlockSpec((3, D, HW), lambda g: (0, 0, 0)),            # voxel locations
            pl.BlockSpec((bb, C, D, HW), lambda g: (g, 0, 0, 0)),     # predicted heatmap
            pl.BlockSpec((bb, 3, D, HW), lambda g: (g, 0, 0, 0)),     # offsets
            pl.BlockSpec((bb, D, HW), lambda g: (g, 0, 0)),           # target heatmap
        ],
        out_specs=pl.BlockSpec((1, 1, 2), lambda g: (g, 0, 0)),
        # TODO(synk): if plain "parallel" doesn't shard steps across v7x's two
        # TensorCores, switch this axis to pltpu.CORE_PARALLEL.
        compiler_params=pltpu.CompilerParams(
            dimension_semantics=("parallel",),
            vmem_limit_bytes=vmem_limit),
    )(skel, loc, pred, off, thm)

    abs_sum = jnp.sum(parts[:, 0, 0])
    count = jnp.sum(parts[:, 0, 1])
    return jnp.where(count > 0, abs_sum / (count * 3.0), jnp.float32(0.0))


def _reference_loss(offsets, target_skeleton, predicted_heatmap, target_heatmap):
    """Pure-JAX replica of the PyTorch forward (L1, mean)."""
    B = offsets.shape[0]
    D, H, W = offsets.shape[2:]
    half = HEATMAP_RESOLUTION / 2.0

    am = jnp.argmax(predicted_heatmap, axis=1)                              # (B,D,H,W)
    overlap = jnp.logical_and(am >= OVERLAP_THRESHOLD,
                              target_heatmap[:, 0] >= OVERLAP_THRESHOLD)
    off_perm = jnp.transpose(offsets, (0, 2, 3, 4, 1))                      # (B,D,H,W,3)

    dd, hh, ww = jnp.meshgrid(jnp.arange(D), jnp.arange(H), jnp.arange(W), indexing="ij")
    loc = jnp.stack([dd, hh, ww], axis=-1).astype(jnp.float32) / half - 1.0  # (D,H,W,3)
    tgt = target_skeleton.reshape(B, 1, 1, 1, 3) - loc[None]
    tgt = jnp.clip(tgt, -1.0 / half, 1.0 / half)

    diff = jnp.abs(off_perm - tgt) * overlap[..., None]
    n = overlap.sum().astype(jnp.float32)
    return jnp.where(n > 0, diff.sum() / (n * 3.0), jnp.float32(0.0))


if __name__ == "__main__":
    key = jax.random.PRNGKey(0)
    B, C, D, H, W = 2, 4, 16, 16, 16
    k1, k2, k3, k4 = jax.random.split(key, 4)

    offsets = jax.random.normal(k1, (B, 3, D, H, W), jnp.float32) * 0.1
    target_skeleton = jax.random.uniform(k2, (B, 1, 3), jnp.float32, minval=-1.0, maxval=1.0)
    predicted_heatmap = jax.random.normal(k3, (B, C, D, H, W), jnp.float32)
    target_heatmap = jax.random.uniform(k4, (B, 1, D, H, W), jnp.float32)

    loss = heatmap_offset_loss(offsets, target_skeleton, predicted_heatmap, target_heatmap)
    loss = jax.block_until_ready(loss)

    ref = jax.block_until_ready(
        _reference_loss(offsets, target_skeleton, predicted_heatmap, target_heatmap))
    assert abs(float(loss) - float(ref)) < 1e-4 * max(1.0, abs(float(ref))), (loss, ref)

    print("KERNEL_OK")
</pallas_src>

<mosaic_0001>
module attributes {stable_mosaic.version = 11 : i64} {
  func.func @kernel(%arg0: i32, %arg1: memref<3x2xf32, #tpu.memory_space<smem>>, %arg2: memref<3x16x256xf32, #tpu.memory_space<vmem>>, %arg3: memref<1x4x16x256xf32, #tpu.memory_space<vmem>>, %arg4: memref<1x3x16x256xf32, #tpu.memory_space<vmem>>, %arg5: memref<1x16x256xf32, #tpu.memory_space<vmem>>, %arg6: memref<1x1x2xf32, #tpu.memory_space<vmem>>) attributes {dimension_semantics = [#tpu.dimension_semantics<parallel>], iteration_bounds = array<i64: 2>, scalar_prefetch = 0 : i64, scratch_operands = 0 : i64, tpu.core_type = #tpu.core_type<tc>, window_params = [{transform_indices = @transform_0, window_bounds = array<i64: 3, 2>}, {pipeline_mode = #tpu.pipeline_mode<synchronous>, transform_indices = @transform_1, window_bounds = array<i64: 3, 16, 256>}, {transform_indices = @transform_2, window_bounds = array<i64: 1, 4, 16, 256>}, {transform_indices = @transform_3, window_bounds = array<i64: 1, 3, 16, 256>}, {transform_indices = @transform_4, window_bounds = array<i64: 1, 16, 256>}, {transform_indices = @transform_5, window_bounds = array<i64: 1, 1, 2>}]} {
    %c0 = arith.constant 0 : index
    %c0_0 = arith.constant 0 : index
    %c0_1 = arith.constant 0 : index
    %0 = vector.load %arg2[%c0, %c0_0, %c0_1] : memref<3x16x256xf32, #tpu.memory_space<vmem>>, vector<1x16x256xf32>
    %1 = vector.shape_cast %0 : vector<1x16x256xf32> to vector<16x256xf32>
    %c1 = arith.constant 1 : index
    %c0_2 = arith.constant 0 : index
    %c0_3 = arith.constant 0 : index
    %2 = vector.load %arg2[%c1, %c0_2, %c0_3] : memref<3x16x256xf32, #tpu.memory_space<vmem>>, vector<1x16x256xf32>
    %3 = vector.shape_cast %2 : vector<1x16x256xf32> to vector<16x256xf32>
    %c2 = arith.constant 2 : index
    %c0_4 = arith.constant 0 : index
    %c0_5 = arith.constant 0 : index
    %4 = vector.load %arg2[%c2, %c0_4, %c0_5] : memref<3x16x256xf32, #tpu.memory_space<vmem>>, vector<1x16x256xf32>
    %5 = vector.shape_cast %4 : vector<1x16x256xf32> to vector<16x256xf32>
    %cst = arith.constant 0.000000e+00 : f32
    %6 = vector.broadcast %cst : f32 to vector<16x256xf32>
    %c0_i32 = arith.constant 0 : i32
    %c1_i32 = arith.constant 1 : i32
    %7 = arith.muli %arg0, %c1_i32 : i32
    %8 = arith.addi %7, %c0_i32 : i32
    %9 = arith.index_cast %c0_i32 : i32 to index
    %c1_6 = arith.constant 1 : index
    %c0_7 = arith.constant 0 : index
    %c0_8 = arith.constant 0 : index
    %10 = vector.load %arg3[%9, %c1_6, %c0_7, %c0_8] : memref<1x4x16x256xf32, #tpu.memory_space<vmem>>, vector<1x1x16x256xf32>
    %11 = vector.shape_cast %10 : vector<1x1x16x256xf32> to vector<16x256xf32>
    %12 = arith.index_cast %c0_i32 : i32 to index
    %c2_9 = arith.constant 2 : index
    %c0_10 = arith.constant 0 : index
    %c0_11 = arith.constant 0 : index
    %13 = vector.load %arg3[%12, %c2_9, %c0_10, %c0_11] : memref<1x4x16x256xf32, #tpu.memory_space<vmem>>, vector<1x1x16x256xf32>
    %14 = vector.shape_cast %13 : vector<1x1x16x256xf32> to vector<16x256xf32>
    %15 = arith.maximumf %11, %14 : vector<16x256xf32>
    %16 = arith.index_cast %c0_i32 : i32 to index
    %c3 = arith.constant 3 : index
    %c0_12 = arith.constant 0 : index
    %c0_13 = arith.constant 0 : index
    %17 = vector.load %arg3[%16, %c3, %c0_12, %c0_13] : memref<1x4x16x256xf32, #tpu.memory_space<vmem>>, vector<1x1x16x256xf32>
    %18 = vector.shape_cast %17 : vector<1x1x16x256xf32> to vector<16x256xf32>
    %19 = arith.maximumf %15, %18 : vector<16x256xf32>
    %20 = arith.index_cast %c0_i32 : i32 to index
    %c0_14 = arith.constant 0 : index
    %c0_15 = arith.constant 0 : index
    %c0_16 = arith.constant 0 : index
    %21 = vector.load %arg3[%20, %c0_14, %c0_15, %c0_16] : memref<1x4x16x256xf32, #tpu.memory_space<vmem>>, vector<1x1x16x256xf32>
    %22 = vector.shape_cast %21 : vector<1x1x16x256xf32> to vector<16x256xf32>
    %23 = arith.cmpf ogt, %19, %22 : vector<16x256xf32>
    %24 = arith.index_cast %c0_i32 : i32 to index
    %c0_17 = arith.constant 0 : index
    %c0_18 = arith.constant 0 : index
    %25 = vector.load %arg5[%24, %c0_17, %c0_18] : memref<1x16x256xf32, #tpu.memory_space<vmem>>, vector<1x16x256xf32>
    %26 = vector.shape_cast %25 : vector<1x16x256xf32> to vector<16x256xf32>
    %cst_19 = arith.constant 5.000000e-01 : f32
    %27 = vector.broadcast %cst_19 : f32 to vector<16x256xf32>
    %28 = arith.cmpf oge, %26, %27 : vector<16x256xf32>
    %29 = arith.andi %23, %28 : vector<16x256xi1>
    %c2_i32 = arith.constant 2 : i32
    %30 = arith.cmpi slt, %8, %c2_i32 : i32
    %31 = vector.broadcast %30 : i1 to vector<16x256xi1>
    %32 = arith.andi %29, %31 : vector<16x256xi1>
    %cst_20 = arith.constant 0.000000e+00 : f32
    %33 = vector.broadcast %cst_20 : f32 to vector<16x256xf32>
    %c0_21 = arith.constant 0 : index
    %34 = arith.index_cast %8 : i32 to index
    %35 = memref.load %arg1[%c0_21, %34] : memref<3x2xf32, #tpu.memory_space<smem>>
    %36 = vector.broadcast %35 : f32 to vector<16x256xf32>
    %37 = arith.subf %36, %1 : vector<16x256xf32>
    %cst_22 = arith.constant -1.250000e-01 : f32
    %cst_23 = arith.constant 1.250000e-01 : f32
    %38 = vector.broadcast %cst_22 : f32 to vector<16x256xf32>
    %39 = arith.maximumf %38, %37 : vector<16x256xf32>
    %40 = vector.broadcast %cst_23 : f32 to vector<16x256xf32>
    %41 = arith.minimumf %40, %39 : vector<16x256xf32>
    %42 = arith.index_cast %c0_i32 : i32 to index
    %c0_24 = arith.constant 0 : index
    %c0_25 = arith.constant 0 : index
    %c0_26 = arith.constant 0 : index
    %43 = vector.load %arg4[%42, %c0_24, %c0_25, %c0_26] : memref<1x3x16x256xf32, #tpu.memory_space<vmem>>, vector<1x1x16x256xf32>
    %44 = vector.shape_cast %43 : vector<1x1x16x256xf32> to vector<16x256xf32>
    %45 = arith.subf %44, %41 : vector<16x256xf32>
    %46 = math.absf %45 : vector<16x256xf32>
    %47 = arith.addf %33, %46 : vector<16x256xf32>
    %c1_27 = arith.constant 1 : index
    %48 = arith.index_cast %8 : i32 to index
    %49 = memref.load %arg1[%c1_27, %48] : memref<3x2xf32, #tpu.memory_space<smem>>
    %50 = vector.broadcast %49 : f32 to vector<16x256xf32>
    %51 = arith.subf %50, %3 : vector<16x256xf32>
    %cst_28 = arith.constant -1.250000e-01 : f32
    %cst_29 = arith.constant 1.250000e-01 : f32
    %52 = vector.broadcast %cst_28 : f32 to vector<16x256xf32>
    %53 = arith.maximumf %52, %51 : vector<16x256xf32>
    %54 = vector.broadcast %cst_29 : f32 to vector<16x256xf32>
    %55 = arith.minimumf %54, %53 : vector<16x256xf32>
    %56 = arith.index_cast %c0_i32 : i32 to index
    %c1_30 = arith.constant 1 : index
    %c0_31 = arith.constant 0 : index
    %c0_32 = arith.constant 0 : index
    %57 = vector.load %arg4[%56, %c1_30, %c0_31, %c0_32] : memref<1x3x16x256xf32, #tpu.memory_space<vmem>>, vector<1x1x16x256xf32>
    %58 = vector.shape_cast %57 : vector<1x1x16x256xf32> to vector<16x256xf32>
    %59 = arith.subf %58, %55 : vector<16x256xf32>
    %60 = math.absf %59 : vector<16x256xf32>
    %61 = arith.addf %47, %60 : vector<16x256xf32>
    %c2_33 = arith.constant 2 : index
    %62 = arith.index_cast %8 : i32 to index
    %63 = memref.load %arg1[%c2_33, %62] : memref<3x2xf32, #tpu.memory_space<smem>>
    %64 = vector.broadcast %63 : f32 to vector<16x256xf32>
    %65 = arith.subf %64, %5 : vector<16x256xf32>
    %cst_34 = arith.constant -1.250000e-01 : f32
    %cst_35 = arith.constant 1.250000e-01 : f32
    %66 = vector.broadcast %cst_34 : f32 to vector<16x256xf32>
    %67 = arith.maximumf %66, %65 : vector<16x256xf32>
    %68 = vector.broadcast %cst_35 : f32 to vector<16x256xf32>
    %69 = arith.minimumf %68, %67 : vector<16x256xf32>
    %70 = arith.index_cast %c0_i32 : i32 to index
    %c2_36 = arith.constant 2 : index
    %c0_37 = arith.constant 0 : index
    %c0_38 = arith.constant 0 : index
    %71 = vector.load %arg4[%70, %c2_36, %c0_37, %c0_38] : memref<1x3x16x256xf32, #tpu.memory_space<vmem>>, vector<1x1x16x256xf32>
    %72 = vector.shape_cast %71 : vector<1x1x16x256xf32> to vector<16x256xf32>
    %73 = arith.subf %72, %69 : vector<16x256xf32>
    %74 = math.absf %73 : vector<16x256xf32>
    %75 = arith.addf %61, %74 : vector<16x256xf32>
    %cst_39 = arith.constant 0.000000e+00 : f32
    %76 = vector.broadcast %cst_39 : f32 to vector<16x256xf32>
    %77 = arith.select %32, %75, %76 : vector<16x256xi1>, vector<16x256xf32>
    %78 = arith.addf %6, %77 : vector<16x256xf32>
    %79 = arith.extui %32 : vector<16x256xi1> to vector<16x256xi32>
    %80 = arith.sitofp %79 : vector<16x256xi32> to vector<16x256xf32>
    %81 = arith.addf %6, %80 : vector<16x256xf32>
    %c1_i32_40 = arith.constant 1 : i32
    %82 = tpu.iota {dimensions = array<i32: 2>} : vector<1x1x2xi32>
    %c0_i32_41 = arith.constant 0 : i32
    %83 = vector.broadcast %c0_i32_41 : i32 to vector<1x1x2xi32>
    %84 = arith.cmpi eq, %82, %83 : vector<1x1x2xi32>
    %85 = vector.shape_cast %78 : vector<16x256xf32> to vector<1x16x256xf32>
    %cst_42 = arith.constant dense<0.000000e+00> : vector<1xf32>
    %86 = vector.multi_reduction <add>, %85, %cst_42 [1, 2] : vector<1x16x256xf32> to vector<1xf32>
    %87 = vector.shape_cast %86 : vector<1xf32> to vector<1x1x1xf32>
    %88 = vector.extract %87[0, 0, 0] : f32 from vector<1x1x1xf32>
    %89 = vector.shape_cast %81 : vector<16x256xf32> to vector<1x16x256xf32>
    %cst_43 = arith.constant dense<0.000000e+00> : vector<1xf32>
    %90 = vector.multi_reduction <add>, %89, %cst_43 [1, 2] : vector<1x16x256xf32> to vector<1xf32>
    %91 = vector.shape_cast %90 : vector<1xf32> to vector<1x1x1xf32>
    %92 = vector.extract %91[0, 0, 0] : f32 from vector<1x1x1xf32>
    %93 = vector.broadcast %88 : f32 to vector<1x1x2xf32>
    %94 = vector.broadcast %92 : f32 to vector<1x1x2xf32>
    %95 = arith.select %84, %93, %94 : vector<1x1x2xi1>, vector<1x1x2xf32>
    %c0_44 = arith.constant 0 : index
    %c0_45 = arith.constant 0 : index
    %c0_46 = arith.constant 0 : index
    %96 = vector.load %arg6[%c0_44, %c0_45, %c0_46] : memref<1x1x2xf32, #tpu.memory_space<vmem>>, vector<1x1x2xf32>
    tpu.vector_store %arg6[%c0_44, %c0_45, %c0_46], %95 {strides = array<i32>} : memref<1x1x2xf32, #tpu.memory_space<vmem>>, vector<1x1x2xf32>,
    return
  }
  func.func @transform_0(%arg0: i32) -> (i32, i32) {
    %c0_i32 = arith.constant 0 : i32
    %c0_i32_0 = arith.constant 0 : i32
    %c0_i32_1 = arith.constant 0 : i32
    return %c0_i32, %c0_i32_0 : i32, i32
  }
  func.func @transform_1(%arg0: i32) -> (i32, i32, i32) {
    %c0_i32 = arith.constant 0 : i32
    %c0_i32_0 = arith.constant 0 : i32
    %c0_i32_1 = arith.constant 0 : i32
    %c0_i32_2 = arith.constant 0 : i32
    return %c0_i32, %c0_i32_0, %c0_i32_1 : i32, i32, i32
  }
  func.func @transform_2(%arg0: i32) -> (i32, i32, i32, i32) {
    %c0_i32 = arith.constant 0 : i32
    %c0_i32_0 = arith.constant 0 : i32
    %c0_i32_1 = arith.constant 0 : i32
    %c0_i32_2 = arith.constant 0 : i32
    return %arg0, %c0_i32, %c0_i32_0, %c0_i32_1 : i32, i32, i32, i32
  }
  func.func @transform_3(%arg0: i32) -> (i32, i32, i32, i32) {
    %c0_i32 = arith.constant 0 : i32
    %c0_i32_0 = arith.constant 0 : i32
    %c0_i32_1 = arith.constant 0 : i32
    %c0_i32_2 = arith.constant 0 : i32
    return %arg0, %c0_i32, %c0_i32_0, %c0_i32_1 : i32, i32, i32, i32
  }
  func.func @transform_4(%arg0: i32) -> (i32, i32, i32) {
    %c0_i32 = arith.constant 0 : i32
    %c0_i32_0 = arith.constant 0 : i32
    %c0_i32_1 = arith.constant 0 : i32
    return %arg0, %c0_i32, %c0_i32_0 : i32, i32, i32
  }
  func.func @transform_5(%arg0: i32) -> (i32, i32, i32) {
    %c0_i32 = arith.constant 0 : i32
    %c0_i32_0 = arith.constant 0 : i32
    %c0_i32_1 = arith.constant 0 : i32
    return %arg0, %c0_i32, %c0_i32_0 : i32, i32, i32
  }
}

</mosaic_0001>

<llo_original>
// kernel: tpu_custom_call.1
$region0: #{tpu_custom_call.1}
  #allocation0 [shape = 'u32[]', space=smem, size = 0x4, offset = 0x4, fixed_abs, tag = 'smem constant byte address 0x4 - core index']
  #allocation1 [shape = 'u32[144,128]{1,0:T(1,128)}', space=vmem, size = 0x12000, scoped, tag = 'internal scratch']
  %s0 = inlined_call_operand.vmem [shape: f32[3,2], index: 0, kind: input, shape index: {}]
  %s1 = inlined_call_operand.hbm [shape: f32[3,16,256], index: 1, kind: input, shape index: {}]
  %s2 = inlined_call_operand.hbm [shape: f32[2,4,16,256], index: 2, kind: input, shape index: {}]
  %s3 = inlined_call_operand.hbm [shape: f32[2,3,16,256], index: 3, kind: input, shape index: {}]
  %s4 = inlined_call_operand.hbm [shape: f32[2,16,256], index: 4, kind: input, shape index: {}]
  %s5 = inlined_call_operand.hbm [shape: f32[2,1,2], index: 5, kind: output, shape index: {}]
  %s6 = sld [smem:[#allocation0]]
  $region73: #{tpu_custom_call.1} parent=0
    _
  %s8 = ssub.s32 1, %s6
  %s9 = scalar_select 0, %s8, %s6
  $region1: #{tpu_custom_call.1} parent=0
    #allocation2 [shape = 'u8[2048]{0}', space=smem, size = 0x800, scoped, tag = 'input window, operand 0, single buffered']
    #allocation3 [shape = 's32[2]{0}', space=sflag, size = 0x8, scoped, tag = 'scoped memory for tpu_custom_call.1']
    #allocation4 [shape = 's32[2]{0}', space=sflag, size = 0x8, scoped, tag = 'scoped memory for tpu_custom_call.1']
    #allocation5 [shape = 's32[2]{0}', space=sflag, size = 0x8, scoped, tag = 'scoped memory for tpu_custom_call.1']
    #allocation6 [shape = 'u8[49152]{0}', space=vmem, size = 0xc000, scoped, tag = 'input window, operand 1, single buffered']
    #allocation7 [shape = 'u8[131072]{0}', space=vmem, size = 0x20000, scoped, tag = 'input window, operand 2']
    #allocation8 [shape = 's32[2]{0}', space=sflag, size = 0x8, scoped, tag = 'scoped memory for tpu_custom_call.1']
    #allocation9 [shape = 'u8[98304]{0}', space=vmem, size = 0x18000, scoped, tag = 'input window, operand 3']
    #allocation10 [shape = 'u8[32768]{0}', space=vmem, size = 0x8000, scoped, tag = 'input window, operand 4']
    #allocation11 [shape = 's32[2]{0}', space=sflag, size = 0x8, scoped, tag = 'scoped memory for tpu_custom_call.1']
    #allocation12 [shape = 'u8[1024]{0}', space=vmem, size = 0x400, scoped, tag = 'output window, operand 0']
    %10 = vsyncpa [#allocation5], 0
    %11 = vsyncpa [#allocation3], 0
    %12 = vsyncpa [#allocation8], 0
    %s13 = scalar_lea.sflag [#allocation8], 1
    %14 = vsyncpa %s13, 0
    %15 = vsyncpa [#allocation11], 0
    %s16 = scalar_lea.sflag [#allocation11], 1
    %17 = vsyncpa %s16, 0
    %18 = vsyncpa [#allocation4], 0
    %s19 = scalar_lea.sflag [#allocation4], 1
    %20 = vsyncpa %s19, 0
    loop: start=0, step=1, limit=4
    $region2: #{tpu_custom_call.1} parent=1 // loop_pre_header
      _
    $region3: #{tpu_custom_call.1} parent=1 // loop_header
      %s22 = sphi 0, %s26
      %p23 = scmp.ge.s32.totalorder %s22, 4
      %s30 = sphi 0, %s30
      %s32 = sphi 0, %s30
      %s33 = sphi 0, %s32
      %s47 = sphi 0, %s33
      %s51 = sphi 0, %s51
      %s53 = sphi 0, %s51
      %s54 = sphi 0, %s53
      %s68 = sphi 0, %s54
      %s74 = sphi 0, %s76
      %s77 = sphi 0, %s74
      %s78 = sphi 0, %s77
      %s94 = sphi 0, %s78
      %s100 = sphi 0, %s102
      %s103 = sphi 0, %s100
      %s104 = sphi 0, %s103
      %s120 = sphi 0, %s104
      %s126 = sphi 0, %s128
      %s129 = sphi 0, %s126
      %s130 = sphi 0, %s129
      %s146 = sphi 0, %s130
      %s152 = sphi 0, %s154
      %s155 = sphi 0, %s152
      %s156 = sphi 0, %s155
      %s172 = sphi 0, %s156
    $region4: #{tpu_custom_call.1} parent=1 // loop_header_branch
      %25 = sbr.rel (%p23) target = $region8
    $region5: #{tpu_custom_call.1} parent=1 // loop_body
      %s27 = ssub.s32 %s22, 1
      %s28 = ssub.s32 %s22, 2
      %s29 = sadd.s32 %s22, 1
      %s31 = sadd.s32 %s30, 1
      %p34 = scmp.eq.s32.totalorder %s22, 1
      %p35 = scmp.ne.s32.totalorder %s30, %s32
      %p36 = scmp.eq.s32.totalorder %s22, 0
      %p37 = por %p35, %p36
      %p38 = scmp.ne.s32.totalorder %s30, %s32
      %p39 = scmp.eq.s32.totalorder %s27, 1
      %p40 = por %p38, %p39
      %p41 = scmp.ne.s32.totalorder %s32, %s33
      %p42 = scmp.eq.s32.totalorder %s27, 0
      %p43 = por %p41, %p42
      %p44 = scmp.ne.s32.totalorder %s32, %s33
      %p45 = scmp.eq.s32.totalorder %s28, 1
      %p46 = por %p44, %p45
      %p48 = scmp.ne.s32.totalorder %s33, %s47
      %p49 = scmp.eq.s32.totalorder %s28, 0
      %p50 = por %p48, %p49
      %s52 = sadd.s32 %s51, 1
      %p55 = scmp.eq.s32.totalorder %s22, 1
      %p56 = scmp.ne.s32.totalorder %s51, %s53
      %p57 = scmp.eq.s32.totalorder %s22, 0
      %p58 = por %p56, %p57
      %p59 = scmp.ne.s32.totalorder %s51, %s53
      %p60 = scmp.eq.s32.totalorder %s27, 1
      %p61 = por %p59, %p60
      %p62 = scmp.ne.s32.totalorder %s53, %s54
      %p63 = scmp.eq.s32.totalorder %s27, 0
      %p64 = por %p62, %p63
      %p65 = scmp.ne.s32.totalorder %s53, %s54
      %p66 = scmp.eq.s32.totalorder %s28, 1
      %p67 = por %p65, %p66
      %p69 = scmp.ne.s32.totalorder %s54, %s68
      %p70 = scmp.eq.s32.totalorder %s28, 0
      %p71 = por %p69, %p70
      %s72 = ssub.s32 %s22, %s29
      %p73 = scmp.eq.s32.totalorder %s72, 0
      %s75 = sadd.s32 %s74, 1
      %s76 = scalar_select %p73, %s74, %s75
      %p79 = pneg %p73
      %p80 = scmp.eq.s32.totalorder %s22, 1
      %p81 = por %p79, %p80
      %p82 = scmp.ne.s32.totalorder %s74, %s77
      %p83 = scmp.eq.s32.totalorder %s22, 0
      %p84 = por %p82, %p83
      %p85 = scmp.ne.s32.totalorder %s74, %s77
      %p86 = scmp.eq.s32.totalorder %s27, 1
      %p87 = por %p85, %p86
      %p88 = scmp.ne.s32.totalorder %s77, %s78
      %p89 = scmp.eq.s32.totalorder %s27, 0
      %p90 = por %p88, %p89
      %p91 = scmp.ne.s32.totalorder %s77, %s78
      %p92 = scmp.eq.s32.totalorder %s28, 1
      %p93 = por %p91, %p92
      %p95 = scmp.ne.s32.totalorder %s78, %s94
      %p96 = scmp.eq.s32.totalorder %s28, 0
      %p97 = por %p95, %p96
      %s98 = ssub.s32 %s22, %s29
      %p99 = scmp.eq.s32.totalorder %s98, 0
      %s101 = sadd.s32 %s100, 1
      %s102 = scalar_select %p99, %s100, %s101
      %p105 = pneg %p99
      %p106 = scmp.eq.s32.totalorder %s22, 1
      %p107 = por %p105, %p106
      %p108 = scmp.ne.s32.totalorder %s100, %s103
      %p109 = scmp.eq.s32.totalorder %s22, 0
      %p110 = por %p108, %p109
      %p111 = scmp.ne.s32.totalorder %s100, %s103
      %p112 = scmp.eq.s32.totalorder %s27, 1
      %p113 = por %p111, %p112
      %p114 = scmp.ne.s32.totalorder %s103, %s104
      %p115 = scmp.eq.s32.totalorder %s27, 0
      %p116 = por %p114, %p115
      %p117 = scmp.ne.s32.totalorder %s103, %s104
      %p118 = scmp.eq.s32.totalorder %s28, 1
      %p119 = por %p117, %p118
      %p121 = scmp.ne.s32.totalorder %s104, %s120
      %p122 = scmp.eq.s32.totalorder %s28, 0
      %p123 = por %p121, %p122
      %s124 = ssub.s32 %s22, %s29
      %p125 = scmp.eq.s32.totalorder %s124, 0
      %s127 = sadd.s32 %s126, 1
      %s128 = scalar_select %p125, %s126, %s127
      %p131 = pneg %p125
      %p132 = scmp.eq.s32.totalorder %s22, 1
      %p133 = por %p131, %p132
      %p134 = scmp.ne.s32.totalorder %s126, %s129
      %p135 = scmp.eq.s32.totalorder %s22, 0
      %p136 = por %p134, %p135
      %p137 = scmp.ne.s32.totalorder %s126, %s129
      %p138 = scmp.eq.s32.totalorder %s27, 1
      %p139 = por %p137, %p138
      %p140 = scmp.ne.s32.totalorder %s129, %s130
      %p141 = scmp.eq.s32.totalorder %s27, 0
      %p142 = por %p140, %p141
      %p143 = scmp.ne.s32.totalorder %s129, %s130
      %p144 = scmp.eq.s32.totalorder %s28, 1
      %p145 = por %p143, %p144
      %p147 = scmp.ne.s32.totalorder %s130, %s146
      %p148 = scmp.eq.s32.totalorder %s28, 0
      %p149 = por %p147, %p148
      %s150 = ssub.s32 %s22, %s29
      %p151 = scmp.eq.s32.totalorder %s150, 0
      %s153 = sadd.s32 %s152, 1
      %s154 = scalar_select %p151, %s152, %s153
      %p157 = pneg %p151
      %p158 = scmp.eq.s32.totalorder %s22, 1
      %p159 = por %p157, %p158
      %p160 = scmp.ne.s32.totalorder %s152, %s155
      %p161 = scmp.eq.s32.totalorder %s22, 0
      %p162 = por %p160, %p161
      %p163 = scmp.ne.s32.totalorder %s152, %s155
      %p164 = scmp.eq.s32.totalorder %s27, 1
      %p165 = por %p163, %p164
      %p166 = scmp.ne.s32.totalorder %s155, %s156
      %p167 = scmp.eq.s32.totalorder %s27, 0
      %p168 = por %p166, %p167
      %p169 = scmp.ne.s32.totalorder %s155, %s156
      %p170 = scmp.eq.s32.totalorder %s28, 1
      %p171 = por %p169, %p170
      %p173 = scmp.ne.s32.totalorder %s156, %s172
      %p174 = scmp.eq.s32.totalorder %s28, 0
      %p175 = por %p173, %p174
      %p176 = scmp.le.s32.totalorder 1, %s22
      %p177 = scmp.lt.s32.totalorder %s22, 3
      %p178 = pnand %p176, %p177
      %p179 = pneg %p178
      // Predicated region
      $region9: #{tpu_custom_call.1} parent=5 // pred_check
        _
      $region10: #{tpu_custom_call.1} parent=5 // pred_check_branch
        %181 = sbr.rel (%p178) target = $region12
      $region11: #{tpu_custom_call.1} parent=5 // pred_region
        %s182 = ssub.s32 %s22, 1
        // Predicated region
        $region13: #{tpu_custom_call.1} parent=11 // pred_check
          %p183 = pneg %p43
        $region14: #{tpu_custom_call.1} parent=11 // pred_check_branch
          %185 = sbr.rel (%p183) target = $region16
        $region15: #{tpu_custom_call.1} parent=11 // pred_region
          %s187 = ssub.s32 64, 64
          %188 = vsyncadd [#allocation5], %s187
          %s190 = sshll.u32 %s0, 4
          %s191 = int_to_ptr.vmem [resolvable:$true] %s190
          %193 = dma.vmem_to_smem %s191, 64, [#allocation2], [#allocation5]
        $region16: #{tpu_custom_call.1} parent=11 // pred_fallthru
          _
        // Predicated region
        $region17: #{tpu_custom_call.1} parent=11 // pred_check
          %p194 = pneg %p64
        $region18: #{tpu_custom_call.1} parent=11 // pred_check_branch
          %196 = sbr.rel (%p194) target = $region20
        $region19: #{tpu_custom_call.1} parent=11 // pred_region
          %s198 = ssub.s32 1536, 1536
          %199 = vsyncadd [#allocation3], %s198
          %s200 = sshll.u32 [#allocation6], 4
          %s201 = int_to_ptr.vmem [resolvable:$true] %s200
          %206 = dma.hbm_to_vmem [thread:$0]  %s1, 1536, %s201, [#allocation3], 256, 256, 16
        $region20: #{tpu_custom_call.1} parent=11 // pred_fallthru
          _
      $region12: #{tpu_custom_call.1} parent=5 // pred_fallthru
        _
      %p207 = scmp.lt.s32.totalorder %s22, 2
      // Predicated region
      $region21: #{tpu_custom_call.1} parent=5 // pred_check
        %p208 = pneg %p207
      $region22: #{tpu_custom_call.1} parent=5 // pred_check_branch
        %210 = sbr.rel (%p208) target = $region24
      $region23: #{tpu_custom_call.1} parent=5 // pred_region
        // Predicated region
        $region25: #{tpu_custom_call.1} parent=23 // pred_check
          %p211 = pneg %p84
        $region26: #{tpu_custom_call.1} parent=23 // pred_check_branch
          %213 = sbr.rel (%p211) target = $region28
        $region27: #{tpu_custom_call.1} parent=23 // pred_region
          %s214 = sand.u32 %s22, 1
          %s215 = scalar_lea.sflag [#allocation8], %s214
          %s216 = sand.u32 %s74, 1
          %s217 = smul.addr %s216, 128
          %s218 = scalar_lea.vmem [#allocation7], %s217
          %s220 = ssub.s32 2048, 2048
          %221 = vsyncadd %s215, %s220
          %s222 = smul.addr %s22, 16
          %s223 = smul.addr %s222, 128
          %s224 = scalar_lea.hbm %s2, %s223
          %s225 = sshll.u32 %s218, 4
          %s226 = int_to_ptr.vmem [resolvable:$true] %s225
          %231 = dma.hbm_to_vmem [thread:$0]  %s224, 2048, %s226, %s215, 256, 256, 16
        $region28: #{tpu_custom_call.1} parent=23 // pred_fallthru
          _
        // Predicated region
        $region29: #{tpu_custom_call.1} parent=23 // pred_check
          %p232 = pneg %p110
        $region30: #{tpu_custom_call.1} parent=23 // pred_check_branch
          %234 = sbr.rel (%p232) target = $region32
        $region31: #{tpu_custom_call.1} parent=23 // pred_region
          %s235 = sand.u32 %s22, 1
          %s236 = scalar_lea.sflag [#allocation8], %s235
          %s237 = sand.u32 %s100, 1
          %s238 = smul.addr %s237, 96
          %s239 = scalar_lea.vmem [#allocation9], %s238
          %s241 = ssub.s32 1536, 1536
          %242 = vsyncadd %s236, %s241
          %s243 = smul.addr %s22, 12
          %s244 = smul.addr %s243, 128
          %s245 = scalar_lea.hbm %s3, %s244
          %s246 = sshll.u32 %s239, 4
          %s247 = int_to_ptr.vmem [resolvable:$true] %s246
          %252 = dma.hbm_to_vmem [thread:$0]  %s245, 1536, %s247, %s236, 256, 256, 16
        $region32: #{tpu_custom_call.1} parent=23 // pred_fallthru
          _
        // Predicated region
        $region33: #{tpu_custom_call.1} parent=23 // pred_check
          %p253 = pneg %p136
        $region34: #{tpu_custom_call.1} parent=23 // pred_check_branch
          %255 = sbr.rel (%p253) target = $region36
        $region35: #{tpu_custom_call.1} parent=23 // pred_region
          %s256 = sand.u32 %s126, 1
          %s257 = scalar_lea.sflag [#allocation11], %s256
          %s258 = sand.u32 %s126, 1
          %s259 = smul.addr %s258, 32
          %s260 = scalar_lea.vmem [#allocation10], %s259
          %s262 = ssub.s32 512, 512
          %263 = vsyncadd %s257, %s262
          %s264 = smul.addr %s22, 4
          %s265 = smul.addr %s264, 128
          %s266 = scalar_lea.hbm %s4, %s265
          %s267 = sshll.u32 %s260, 4
          %s268 = int_to_ptr.vmem [resolvable:$true] %s267
          %273 = dma.hbm_to_vmem [thread:$0]  %s266, 512, %s268, %s257, 256, 256, 16
        $region36: #{tpu_custom_call.1} parent=23 // pred_fallthru
          _
      $region24: #{tpu_custom_call.1} parent=5 // pred_fallthru
        _
      %p274 = scmp.le.s32.totalorder 1, %s22
      %p275 = scmp.lt.s32.totalorder %s22, 3
      %p276 = pnand %p274, %p275
      %p277 = pneg %p276
      // Predicated region
      $region37: #{tpu_custom_call.1} parent=5 // pred_check
        _
      $region38: #{tpu_custom_call.1} parent=5 // pred_check_branch
        %279 = sbr.rel (%p276) target = $region40
      $region39: #{tpu_custom_call.1} parent=5 // pred_region
        %s280 = ssub.s32 %s22, 1
        // Predicated region
        $region41: #{tpu_custom_call.1} parent=39 // pred_check
          %p281 = pneg %p43
        $region42: #{tpu_custom_call.1} parent=39 // pred_check_branch
          %283 = sbr.rel (%p281) target = $region44
        $region43: #{tpu_custom_call.1} parent=39 // pred_region
          %284 = dma.done [#allocation5], 64
        $region44: #{tpu_custom_call.1} parent=39 // pred_fallthru
          _
        // Predicated region
        $region45: #{tpu_custom_call.1} parent=39 // pred_check
          %p285 = pneg %p64
        $region46: #{tpu_custom_call.1} parent=39 // pred_check_branch
          %287 = sbr.rel (%p285) target = $region48
        $region47: #{tpu_custom_call.1} parent=39 // pred_region
          %288 = dma.done [#allocation3], 1536
        $region48: #{tpu_custom_call.1} parent=39 // pred_fallthru
          _
        %s289 = sand.u32 %s27, 1
        %s290 = scalar_lea.sflag [#allocation8], %s289
        %s291 = sand.u32 %s77, 1
        %s292 = smul.addr %s291, 128
        %s293 = scalar_lea.vmem [#allocation7], %s292
        // Predicated region
        $region49: #{tpu_custom_call.1} parent=39 // pred_check
          %p294 = pneg %p90
        $region50: #{tpu_custom_call.1} parent=39 // pred_check_branch
          %296 = sbr.rel (%p294) target = $region52
        $region51: #{tpu_custom_call.1} parent=39 // pred_region
          %297 = dma.done %s290, 2048
        $region52: #{tpu_custom_call.1} parent=39 // pred_fallthru
          _
        %s298 = sand.u32 %s27, 1
        %s299 = scalar_lea.sflag [#allocation8], %s298
        %s300 = sand.u32 %s103, 1
        %s301 = smul.addr %s300, 96
        %s302 = scalar_lea.vmem [#allocation9], %s301
        // Predicated region
        $region53: #{tpu_custom_call.1} parent=39 // pred_check
          %p303 = pneg %p116
        $region54: #{tpu_custom_call.1} parent=39 // pred_check_branch
          %305 = sbr.rel (%p303) target = $region56
        $region55: #{tpu_custom_call.1} parent=39 // pred_region
          %306 = dma.done %s299, 1536
        $region56: #{tpu_custom_call.1} parent=39 // pred_fallthru
          _
        %s307 = sand.u32 %s129, 1
        %s308 = scalar_lea.sflag [#allocation11], %s307
        %s309 = sand.u32 %s129, 1
        %s310 = smul.addr %s309, 32
        %s311 = scalar_lea.vmem [#allocation10], %s310
        // Predicated region
        $region57: #{tpu_custom_call.1} parent=39 // pred_check
          %p312 = pneg %p142
        $region58: #{tpu_custom_call.1} parent=39 // pred_check_branch
          %314 = sbr.rel (%p312) target = $region60
        $region59: #{tpu_custom_call.1} parent=39 // pred_region
          %315 = dma.done %s308, 512
        $region60: #{tpu_custom_call.1} parent=39 // pred_fallthru
          _
        %316 = sfence
        %p317 = pneg %p43
        %p318 = pneg %p40
        %p319 = pneg %p64
        %p320 = pneg %p61
        %s321 = sand.u32 %s27, 1
        %s322 = scalar_lea.sflag [#allocation8], %s321
        %s323 = sand.u32 %s77, 1
        %s324 = smul.addr %s323, 128
        %s325 = scalar_lea.vmem [#allocation7], %s324
        %p326 = pneg %p90
        %p327 = pneg %p87
        %s328 = sand.u32 %s27, 1
        %s329 = scalar_lea.sflag [#allocation8], %s328
        %s330 = sand.u32 %s103, 1
        %s331 = smul.addr %s330, 96
        %s332 = scalar_lea.vmem [#allocation9], %s331
        %p333 = pneg %p116
        %p334 = pneg %p113
        %s335 = sand.u32 %s129, 1
        %s336 = scalar_lea.sflag [#allocation11], %s335
        %s337 = sand.u32 %s129, 1
        %s338 = smul.addr %s337, 32
        %s339 = scalar_lea.vmem [#allocation10], %s338
        %p340 = pneg %p142
        %p341 = pneg %p139
        %p342 = pneg %p168
        %p343 = pneg %p165
        %s344 = sand.u32 %s155, 1
        %s345 = scalar_lea.sflag [#allocation4], %s344
        %s346 = sand.u32 %s155, 1
        %s347 = scalar_lea.vmem [#allocation12], %s346
        %v348 = vld [vmem:[#allocation6] sm:$0xff]
        %v349 = vld [vmem:[#allocation6 + $0x8] sm:$0xff]
        %v350 = vld [vmem:[#allocation6 + $0x10] sm:$0xff]
        %v351 = vld [vmem:[#allocation6 + $0x18] sm:$0xff]
        %s352 = scalar_lea.vmem [#allocation6], 32
        %v353 = vld [vmem:[%s352] sm:$0xff]
        %v354 = vld [vmem:[%s352 + $0x8] sm:$0xff]
        %v355 = vld [vmem:[%s352 + $0x10] sm:$0xff]
        %v356 = vld [vmem:[%s352 + $0x18] sm:$0xff]
        %s357 = scalar_lea.vmem [#allocation6], 64
        %v358 = vld [vmem:[%s357] sm:$0xff]
        %v359 = vld [vmem:[%s357 + $0x8] sm:$0xff]
        %v360 = vld [vmem:[%s357 + $0x10] sm:$0xff]
        %v361 = vld [vmem:[%s357 + $0x18] sm:$0xff]
        %s362 = scalar_lea.vmem %s293, 32 [#allocation7]
        %v363 = vld [vmem:[%s362] sm:$0xff]
        %v364 = vld [vmem:[%s362 + $0x8] sm:$0xff]
        %v365 = vld [vmem:[%s362 + $0x10] sm:$0xff]
        %v366 = vld [vmem:[%s362 + $0x18] sm:$0xff]
        %s367 = scalar_lea.vmem %s293, 64 [#allocation7]
        %v368 = vld [vmem:[%s367] sm:$0xff]
        %v369 = vld [vmem:[%s367 + $0x8] sm:$0xff]
        %v370 = vld [vmem:[%s367 + $0x10] sm:$0xff]
        %v371 = vld [vmem:[%s367 + $0x18] sm:$0xff]
        %v372 = vmax.f32 %v363, %v368
        %v373 = vmax.f32 %v364, %v369
        %v374 = vmax.f32 %v365, %v370
        %v375 = vmax.f32 %v366, %v371
        %s376 = scalar_lea.vmem %s293, 96 [#allocation7]
        %v377 = vld [vmem:[%s376] sm:$0xff]
        %v378 = vld [vmem:[%s376 + $0x8] sm:$0xff]
        %v379 = vld [vmem:[%s376 + $0x10] sm:$0xff]
        %v380 = vld [vmem:[%s376 + $0x18] sm:$0xff]
        %v381 = vmax.f32 %v372, %v377
        %v382 = vmax.f32 %v373, %v378
        %v383 = vmax.f32 %v374, %v379
        %v384 = vmax.f32 %v375, %v380
        %v385 = vld [vmem:[%s293] sm:$0xff]
        %v386 = vld [vmem:[%s293 + $0x8] sm:$0xff]
        %v387 = vld [vmem:[%s293 + $0x10] sm:$0xff]
        %v388 = vld [vmem:[%s293 + $0x18] sm:$0xff]
        %vm389 = vcmp.gt.f32.partialorder %v381, %v385
        %vm390 = vcmp.gt.f32.partialorder %v382, %v386
        %vm391 = vcmp.gt.f32.partialorder %v383, %v387
        %vm392 = vcmp.gt.f32.partialorder %v384, %v388
        %v393 = vld [vmem:[%s311] sm:$0xff]
        %v394 = vld [vmem:[%s311 + $0x8] sm:$0xff]
        %v395 = vld [vmem:[%s311 + $0x10] sm:$0xff]
        %v396 = vld [vmem:[%s311 + $0x18] sm:$0xff]
        %vm397 = vcmp.ge.f32.partialorder %v393, 0.5
        %vm398 = vcmp.ge.f32.partialorder %v394, 0.5
        %vm399 = vcmp.ge.f32.partialorder %v395, 0.5
        %vm400 = vcmp.ge.f32.partialorder %v396, 0.5
        %vm401 = vmand %vm389, %vm397
        %vm402 = vmand %vm390, %vm398
        %vm403 = vmand %vm391, %vm399
        %vm404 = vmand %vm392, %vm400
        %p405 = scmp.lt.s32.totalorder %s27, 2
        %s406 = scalar_select %p405, 1, 0
        %v407 = vstv %s406
        %vm408 = vcmp.eq.s32.totalorder %v407, 1
        %vm409 = vmand %vm401, %vm408
        %vm410 = vmand %vm402, %vm408
        %vm411 = vmand %vm403, %vm408
        %vm412 = vmand %vm404, %vm408
        %s413 = sld [smem:[#allocation2 + %s27]]
        %v414 = vstv %s413
        %v415 = vsub.f32 %v414, %v348
        %v416 = vsub.f32 %v414, %v349
        %v417 = vsub.f32 %v414, %v350
        %v418 = vsub.f32 %v414, %v351
        %v419 = vmax.f32 %v415, -0.125
        %v420 = vmax.f32 %v416, -0.125
        %v421 = vmax.f32 %v417, -0.125
        %v422 = vmax.f32 %v418, -0.125
        %v423 = vmin.f32 %v419, 0.125
        %v424 = vmin.f32 %v420, 0.125
        %v425 = vmin.f32 %v421, 0.125
        %v426 = vmin.f32 %v422, 0.125
        %v427 = vld [vmem:[%s302] sm:$0xff]
        %v428 = vld [vmem:[%s302 + $0x8] sm:$0xff]
        %v429 = vld [vmem:[%s302 + $0x10] sm:$0xff]
        %v430 = vld [vmem:[%s302 + $0x18] sm:$0xff]
        %v431 = vsub.f32 %v427, %v423
        %v432 = vsub.f32 %v428, %v424
        %v433 = vsub.f32 %v429, %v425
        %v434 = vsub.f32 %v430, %v426
        %v435 = vand.u32 2147483647, %v431
        %v436 = vand.u32 2147483647, %v432
        %v437 = vand.u32 2147483647, %v433
        %v438 = vand.u32 2147483647, %v434
        %v439 = vadd.f32 %v435, 0.0
        %v440 = vadd.f32 %v436, 0.0
        %v441 = vadd.f32 %v437, 0.0
        %v442 = vadd.f32 %v438, 0.0
        %s443 = sshra.s32 %s27, 7
        %s444 = sand.u32 %s27, 127
        %s445 = sadd.s32 %s443, 1
        %s446 = smul.u32 %s445, 128
        %s447 = sshra.s32 %s27, 7
        %s448 = sand.u32 %s27, 127
        %s449 = sadd.s32 %s446, %s448
        %s450 = sld [smem:[#allocation2 + %s449]]
        %v451 = vstv %s450
        %v452 = vsub.f32 %v451, %v353
        %v453 = vsub.f32 %v451, %v354
        %v454 = vsub.f32 %v451, %v355
        %v455 = vsub.f32 %v451, %v356
        %v456 = vmax.f32 %v452, -0.125
        %v457 = vmax.f32 %v453, -0.125
        %v458 = vmax.f32 %v454, -0.125
        %v459 = vmax.f32 %v455, -0.125
        %v460 = vmin.f32 %v456, 0.125
        %v461 = vmin.f32 %v457, 0.125
        %v462 = vmin.f32 %v458, 0.125
        %v463 = vmin.f32 %v459, 0.125
        %s464 = scalar_lea.vmem %s302, 32 [#allocation9]
        %v465 = vld [vmem:[%s464] sm:$0xff]
        %v466 = vld [vmem:[%s464 + $0x8] sm:$0xff]
        %v467 = vld [vmem:[%s464 + $0x10] sm:$0xff]
        %v468 = vld [vmem:[%s464 + $0x18] sm:$0xff]
        %v469 = vsub.f32 %v465, %v460
        %v470 = vsub.f32 %v466, %v461
        %v471 = vsub.f32 %v467, %v462
        %v472 = vsub.f32 %v468, %v463
        %v473 = vand.u32 2147483647, %v469
        %v474 = vand.u32 2147483647, %v470
        %v475 = vand.u32 2147483647, %v471
        %v476 = vand.u32 2147483647, %v472
        %v477 = vadd.f32 %v439, %v473
        %v478 = vadd.f32 %v440, %v474
        %v479 = vadd.f32 %v441, %v475
        %v480 = vadd.f32 %v442, %v476
        %s481 = sadd.s32 %s443, 2
        %s482 = smul.u32 %s481, 128
        %s483 = sadd.s32 %s482, %s448
        %s484 = sld [smem:[#allocation2 + %s483]]
        %v485 = vstv %s484
        %v486 = vsub.f32 %v485, %v358
        %v487 = vsub.f32 %v485, %v359
        %v488 = vsub.f32 %v485, %v360
        %v489 = vsub.f32 %v485, %v361
        %v490 = vmax.f32 %v486, -0.125
        %v491 = vmax.f32 %v487, -0.125
        %v492 = vmax.f32 %v488, -0.125
        %v493 = vmax.f32 %v489, -0.125
        %v494 = vmin.f32 %v490, 0.125
        %v495 = vmin.f32 %v491, 0.125
        %v496 = vmin.f32 %v492, 0.125
        %v497 = vmin.f32 %v493, 0.125
        %s498 = scalar_lea.vmem %s302, 64 [#allocation9]
        %v499 = vld [vmem:[%s498] sm:$0xff]
        %v500 = vld [vmem:[%s498 + $0x8] sm:$0xff]
        %v501 = vld [vmem:[%s498 + $0x10] sm:$0xff]
        %v502 = vld [vmem:[%s498 + $0x18] sm:$0xff]
        %v503 = vsub.f32 %v499, %v494
        %v504 = vsub.f32 %v500, %v495
        %v505 = vsub.f32 %v501, %v496
        %v506 = vsub.f32 %v502, %v497
        %v507 = vand.u32 2147483647, %v503
        %v508 = vand.u32 2147483647, %v504
        %v509 = vand.u32 2147483647, %v505
        %v510 = vand.u32 2147483647, %v506
        %v511 = vadd.f32 %v477, %v507
        %v512 = vadd.f32 %v478, %v508
        %v513 = vadd.f32 %v479, %v509
        %v514 = vadd.f32 %v480, %v510
        %v515 = vsel %vm409, %v511, 0.0
        %v516 = vsel %vm410, %v512, 0.0
        %v517 = vsel %vm411, %v513, 0.0
        %v518 = vsel %vm412, %v514, 0.0
        %v519 = vadd.f32 %v515, 0.0
        %v520 = vadd.f32 %v516, 0.0
        %v521 = vadd.f32 %v517, 0.0
        %v522 = vadd.f32 %v518, 0.0
        %v523 = vsel %vm409, 1, 0
        %v524 = vsel %vm410, 1, 0
        %v525 = vsel %vm411, 1, 0
        %v526 = vsel %vm412, 1, 0
        %v527 = vcvt.s32.f32 %v523
        %v528 = vcvt.s32.f32 %v524
        %v529 = vcvt.s32.f32 %v525
        %v530 = vcvt.s32.f32 %v526
        %v531 = vadd.f32 %v527, 0.0
        %v532 = vadd.f32 %v528, 0.0
        %v533 = vadd.f32 %v529, 0.0
        %v534 = vadd.f32 %v530, 0.0
        %v535 = vlaneseq
        %v536 = vand.u32 %v535, 127
        %vm537 = vcmp.eq.s32.totalorder %v536, 0
        %v538 = vadd.f32 %v519, %v520
        %v539 = vadd.f32 %v538, %v521
        %v540 = vadd.f32 %v539, %v522
        %541 = vadd.xlane.f32.xlu0 %v540
        %v542 = vpop.xlane.xlu0 %541
        %v543 = vrot.slane %v542, 4
        %v544 = vadd.f32 %v542, %v543
        %v545 = vrot.slane %v544, 2
        %v546 = vadd.f32 %v544, %v545
        %v547 = vrot.slane %v546, 1
        %v548 = vadd.f32 %v546, %v547
        %s549 = vtos %v548
        %v550 = vadd.f32 %v531, %v532
        %v551 = vadd.f32 %v550, %v533
        %v552 = vadd.f32 %v551, %v534
        %553 = vadd.xlane.f32.xlu0 %v552
        %v554 = vpop.xlane.xlu0 %553
        %v555 = vrot.slane %v554, 4
        %v556 = vadd.f32 %v554, %v555
        %v557 = vrot.slane %v556, 2
        %v558 = vadd.f32 %v556, %v557
        %v559 = vrot.slane %v558, 1
        %v560 = vadd.f32 %v558, %v559
        %s561 = vtos %v560
        %v562 = vstv %s549
        %v563 = vstv %s561
        %v564 = vsel %vm537, %v562, %v563
        %vm565 = vcmask 8192
        %566 = vst.msk [vmem:[%s347] sm:$0x1] %vm565, %v564
        %s567 = sand.u32 %s155, 1
        %s568 = scalar_lea.sflag [#allocation4], %s567
        %s569 = sand.u32 %s155, 1
        %s570 = scalar_lea.vmem [#allocation12], %s569
        // Predicated region
        $region61: #{tpu_custom_call.1} parent=39 // pred_check
          %p571 = pneg %p165
        $region62: #{tpu_custom_call.1} parent=39 // pred_check_branch
          %573 = sbr.rel (%p571) target = $region64
        $region63: #{tpu_custom_call.1} parent=39 // pred_region
          %s575 = ssub.s32 16, 16
          %576 = vsyncadd %s568, %s575
          %s577 = smul.addr %s27, 16
          %s578 = scalar_lea.hbm %s5, %s577
          %s580 = sshll.u32 %s570, 4
          %s581 = int_to_ptr.vmem [resolvable:$true] %s580
          %583 = dma.vmem_to_hbm [thread:$0]  %s581, 16, %s578, %s568
        $region64: #{tpu_custom_call.1} parent=39 // pred_fallthru
          _
      $region40: #{tpu_custom_call.1} parent=5 // pred_fallthru
        _
      %p584 = scmp.le.s32.totalorder 2, %s22
      // Predicated region
      $region65: #{tpu_custom_call.1} parent=5 // pred_check
        %p585 = pneg %p584
      $region66: #{tpu_custom_call.1} parent=5 // pred_check_branch
        %587 = sbr.rel (%p585) target = $region68
      $region67: #{tpu_custom_call.1} parent=5 // pred_region
        %s588 = ssub.s32 %s22, 2
        // Predicated region
        $region69: #{tpu_custom_call.1} parent=67 // pred_check
          %p589 = pneg %p171
        $region70: #{tpu_custom_call.1} parent=67 // pred_check_branch
          %591 = sbr.rel (%p589) target = $region72
        $region71: #{tpu_custom_call.1} parent=67 // pred_region
          %s592 = sand.u32 %s156, 1
          %s593 = scalar_lea.sflag [#allocation4], %s592
          %s594 = sand.u32 %s156, 1
          %s595 = scalar_lea.vmem [#allocation12], %s594
          %596 = dma.done %s593, 16
        $region72: #{tpu_custom_call.1} parent=67 // pred_fallthru
          _
      $region68: #{tpu_custom_call.1} parent=5 // pred_fallthru
        _
    $region6: #{tpu_custom_call.1} parent=1 // loop_footer
      %s26 = sadd.s32 1, %s22
    $region7: #{tpu_custom_call.1} parent=1 // loop_footer_branch
      %21 = sbr.rel target = $region3
    $region8: #{tpu_custom_call.1} parent=1 // loop_exit
      _
    %597 = vsyncpa [#allocation3], 1
    %s598 = scalar_lea.sflag [#allocation3], 1
    %599 = vsyncpa %s598, 1
    %600 = vsyncpa [#allocation8], 1
    %s601 = scalar_lea.sflag [#allocation8], 1
    %602 = vsyncpa %s601, 1
    %603 = vsyncpa [#allocation11], 1
    %s604 = scalar_lea.sflag [#allocation11], 1
    %605 = vsyncpa %s604, 1
    %606 = vsyncpa [#allocation4], 1
    %s607 = scalar_lea.sflag [#allocation4], 1
    %608 = vsyncpa %s607, 1
    %609 = vsyncpa [#allocation5], 1
    %s610 = scalar_lea.sflag [#allocation5], 1
    %611 = vsyncpa %s610, 1

</llo_original>
